<compile_context>
chip_gen: v5e
topology: v5e:2x2
jax: 0.10.0
libtpu: 0.0.40
codegen_flags: <defaults>
</compile_context>

<pallas_src>
import jax
import jax.numpy as jnp
from jax.experimental import pallas as pl
from jax.experimental.pallas import tpu as pltpu


def _make_club_kernel(num_layers, n_samples):
    inv_n = 1.0 / float(n_samples)

    def kernel(*refs):
        x_ref, y_ref = refs[0], refs[1]
        wb_refs = refs[2:2 + 2 * num_layers]
        out_ref = refs[2 + 2 * num_layers]

        # ---- fused MLP stack: one MXU matmul per layer ------------------------
        h = x_ref[...]                                        # (N, v_dim) f32
        for i in range(num_layers):
            w = wb_refs[2 * i][...]
            b = wb_refs[2 * i + 1][...]
            h = jnp.dot(h, w, preferred_element_type=jnp.float32) + b
            if i < num_layers - 1:                            # ReLU on hidden layers only
                h = jnp.maximum(h, 0.0)
        # h: (N, 2); column 0 = mu, column 1 = logvar pre-tanh
        mu = h[:, 0:1]                                        # (N, 1)
        logvar = jnp.tanh(h[:, 1:2])                          # (N, 1)

        # ---- CLUB estimator ---------------------------------------------------
        y = y_ref[...]                                        # (N, y_dim)
        inv_2var = 0.5 * jnp.exp(-logvar)                     # (N, 1), EUP exp

        # positive_i = -(mu_i - y_i)^2 / (2 exp(logvar_i))
        d = mu - y                                            # broadcast over y_dim
        positive = -(d * d) * inv_2var                        # (N, y_dim)

        # negative_i = -mean_j (y_j - mu_i)^2 / (2 exp(logvar_i))
        #            = -(E[y^2] - 2 mu_i E[y] + mu_i^2) / (2 exp(logvar_i))
        ey = jnp.sum(y, axis=0, keepdims=True) * inv_n        # (1, y_dim)
        ey2 = jnp.sum(y * y, axis=0, keepdims=True) * inv_n   # (1, y_dim)
        mean_sq = ey2 - 2.0 * mu * ey + mu * mu               # (N, y_dim)
        negative = -mean_sq * inv_2var                        # (N, y_dim)

        # (positive.sum(-1) - negative.sum(-1)).mean()
        per_sample = jnp.sum(positive - negative, axis=1, keepdims=True)   # (N, 1)
        out_ref[...] = jnp.sum(per_sample, axis=0, keepdims=True) * inv_n  # (1, 1)

    return kernel


def _fuse_params(mu_layers, logvar_layers):
    """Fuse the two MLPs: layer 0 -> concat outputs, deeper layers -> block-diag."""
    fused = []
    for i, ((wm, bm), (wl, bl)) in enumerate(zip(mu_layers, logvar_layers)):
        if i == 0:
            w = jnp.concatenate([wm, wl], axis=1)
        else:
            top = jnp.concatenate(
                [wm, jnp.zeros((wm.shape[0], wl.shape[1]), wm.dtype)], axis=1)
            bot = jnp.concatenate(
                [jnp.zeros((wl.shape[0], wm.shape[1]), wl.dtype), wl], axis=1)
            w = jnp.concatenate([top, bot], axis=0)
        b = jnp.concatenate([bm, bl], axis=1)
        fused.append((w.astype(jnp.float32), b.astype(jnp.float32)))
    return fused


def club_forward(x_samples, y_samples, mu_layers, logvar_layers):
    """CLUB.forward(x_samples, y_samples) -> scalar MI upper-bound estimate."""
    if len(mu_layers) != len(logvar_layers):
        # TODO(synk): unequal-depth p_mu/p_logvar networks are not fused; add a
        # separate two-branch kernel path for that case.
        raise NotImplementedError("fused CLUB kernel assumes equal-depth MLPs")

    fused = _fuse_params(mu_layers, logvar_layers)
    n_layers = len(fused)
    flat_wb = [a for wb in fused for a in wb]
    n_samples = x_samples.shape[0]

    vmem = pl.BlockSpec(memory_space=pltpu.MemorySpace.VMEM)
    out = pl.pallas_call(
        _make_club_kernel(n_layers, n_samples),
        out_shape=jax.ShapeDtypeStruct((1, 1), jnp.float32),
        in_specs=[vmem] * (2 + 2 * n_layers),
        out_specs=vmem,
    )(x_samples.astype(jnp.float32), y_samples.astype(jnp.float32), *flat_wb)
    return out[0, 0]


def init_params(key, v_dim, mu_hidden_sizes, logvar_hidden_sizes):
    def make_mlp(k, in_dim, hidden_sizes):
        dims = [in_dim] + list(hidden_sizes) + [1]
        layers = []
        keys = jax.random.split(k, len(dims) - 1)
        for kk, (di, do) in zip(keys, zip(dims[:-1], dims[1:])):
            kw, kb = jax.random.split(kk)
            w = jax.random.normal(kw, (di, do), jnp.float32) / jnp.sqrt(di)
            b = 0.05 * jax.random.normal(kb, (1, do), jnp.float32)
            layers.append((w, b))
        return layers

    kmu, klv = jax.random.split(key)
    return (make_mlp(kmu, v_dim, mu_hidden_sizes),
            make_mlp(klv, v_dim, logvar_hidden_sizes))


def reference_forward(x, y, mu_layers, logvar_layers):
    """Pure-JAX reference mirroring the PyTorch CLUB.forward exactly."""
    def mlp(h, layers):
        for i, (w, b) in enumerate(layers):
            h = h @ w + b
            if i < len(layers) - 1:
                h = jnp.maximum(h, 0.0)
        return h

    mu = mlp(x, mu_layers)                              # (N, 1)
    logvar = jnp.tanh(mlp(x, logvar_layers))            # (N, 1)
    positive = -(mu - y) ** 2 / 2.0 / jnp.exp(logvar)
    prediction_1 = mu[:, None, :]                       # (N, 1, 1)
    y_samples_1 = y[None, :, :]                         # (1, N, y_dim)
    negative = -jnp.mean((y_samples_1 - prediction_1) ** 2, axis=1) \
        / 2.0 / jnp.exp(logvar)
    return jnp.mean(positive.sum(-1) - negative.sum(-1))


if __name__ == "__main__":
    key = jax.random.PRNGKey(0)
    kx, ky, kp = jax.random.split(key, 3)

    N, V_DIM = 128, 32
    MU_HIDDEN = [64, 64]
    LOGVAR_HIDDEN = [64, 64]

    mu_layers, logvar_layers = init_params(kp, V_DIM, MU_HIDDEN, LOGVAR_HIDDEN)
    x = jax.random.normal(kx, (N, V_DIM), jnp.float32)
    y = jax.random.normal(ky, (N, 1), jnp.float32)

    out = club_forward(x, y, mu_layers, logvar_layers)
    out = jax.block_until_ready(out)

    ref = reference_forward(x, y, mu_layers, logvar_layers)
    assert out.shape == ()
    assert jnp.allclose(out, ref, atol=1e-4, rtol=1e-4), (out, ref)

    print("KERNEL_OK")
</pallas_src>

<mosaic_0001>
module attributes {stable_mosaic.version = 11 : i64} {
  func.func @kernel(%arg0: memref<128x32xf32, #tpu.memory_space<vmem>>, %arg1: memref<128x1xf32, #tpu.memory_space<vmem>>, %arg2: memref<32x128xf32, #tpu.memory_space<vmem>>, %arg3: memref<1x128xf32, #tpu.memory_space<vmem>>, %arg4: memref<128x128xf32, #tpu.memory_space<vmem>>, %arg5: memref<1x128xf32, #tpu.memory_space<vmem>>, %arg6: memref<128x2xf32, #tpu.memory_space<vmem>>, %arg7: memref<1x2xf32, #tpu.memory_space<vmem>>, %arg8: memref<1x1xf32, #tpu.memory_space<vmem>>) attributes {dimension_semantics = [], scalar_prefetch = 0 : i64, scratch_operands = 0 : i64, tpu.core_type = #tpu.core_type<tc>} {
    %c0 = arith.constant 0 : index
    %c0_0 = arith.constant 0 : index
    %0 = vector.load %arg0[%c0, %c0_0] : memref<128x32xf32, #tpu.memory_space<vmem>>, vector<128x32xf32>
    %c0_1 = arith.constant 0 : index
    %c0_2 = arith.constant 0 : index
    %1 = vector.load %arg2[%c0_1, %c0_2] : memref<32x128xf32, #tpu.memory_space<vmem>>, vector<32x128xf32>
    %c0_3 = arith.constant 0 : index
    %c0_4 = arith.constant 0 : index
    %2 = vector.load %arg3[%c0_3, %c0_4] : memref<1x128xf32, #tpu.memory_space<vmem>>, vector<1x128xf32>
    %cst = arith.constant dense<0.000000e+00> : vector<128x128xf32>
    %3 = tpu.matmul %0, %1, %cst {dimension_numbers = #tpu.dot_dimension_numbers<[1], [0], [0], [1], [0, 0, 1, 1], [], []>} : vector<128x32xf32>, vector<32x128xf32>, vector<128x128xf32> -> vector<128x128xf32>
    %4 = vector.broadcast %2 : vector<1x128xf32> to vector<128x128xf32>
    %5 = arith.addf %3, %4 : vector<128x128xf32>
    %cst_5 = arith.constant 0.000000e+00 : f32
    %6 = vector.broadcast %cst_5 : f32 to vector<128x128xf32>
    %7 = arith.maximumf %5, %6 : vector<128x128xf32>
    %c0_6 = arith.constant 0 : index
    %c0_7 = arith.constant 0 : index
    %8 = vector.load %arg4[%c0_6, %c0_7] : memref<128x128xf32, #tpu.memory_space<vmem>>, vector<128x128xf32>
    %c0_8 = arith.constant 0 : index
    %c0_9 = arith.constant 0 : index
    %9 = vector.load %arg5[%c0_8, %c0_9] : memref<1x128xf32, #tpu.memory_space<vmem>>, vector<1x128xf32>
    %cst_10 = arith.constant dense<0.000000e+00> : vector<128x128xf32>
    %10 = tpu.matmul %7, %8, %cst_10 {dimension_numbers = #tpu.dot_dimension_numbers<[1], [0], [0], [1], [0, 0, 1, 1], [], []>} : vector<128x128xf32>, vector<128x128xf32>, vector<128x128xf32> -> vector<128x128xf32>
    %11 = vector.broadcast %9 : vector<1x128xf32> to vector<128x128xf32>
    %12 = arith.addf %10, %11 : vector<128x128xf32>
    %cst_11 = arith.constant 0.000000e+00 : f32
    %13 = vector.broadcast %cst_11 : f32 to vector<128x128xf32>
    %14 = arith.maximumf %12, %13 : vector<128x128xf32>
    %c0_12 = arith.constant 0 : index
    %c0_13 = arith.constant 0 : index
    %15 = vector.load %arg6[%c0_12, %c0_13] : memref<128x2xf32, #tpu.memory_space<vmem>>, vector<128x2xf32>
    %c0_14 = arith.constant 0 : index
    %c0_15 = arith.constant 0 : index
    %16 = vector.load %arg7[%c0_14, %c0_15] : memref<1x2xf32, #tpu.memory_space<vmem>>, vector<1x2xf32>
    %cst_16 = arith.constant dense<0.000000e+00> : vector<128x2xf32>
    %17 = tpu.matmul %14, %15, %cst_16 {dimension_numbers = #tpu.dot_dimension_numbers<[1], [0], [0], [1], [0, 0, 1, 1], [], []>} : vector<128x128xf32>, vector<128x2xf32>, vector<128x2xf32> -> vector<128x2xf32>
    %18 = vector.broadcast %16 : vector<1x2xf32> to vector<128x2xf32>
    %19 = arith.addf %17, %18 : vector<128x2xf32>
    %20 = vector.extract_strided_slice %19 {offsets = [0, 0], sizes = [128, 1], strides = [1, 1]} : vector<128x2xf32> to vector<128x1xf32>
    %21 = vector.extract_strided_slice %19 {offsets = [0, 1], sizes = [128, 1], strides = [1, 1]} : vector<128x2xf32> to vector<128x1xf32>
    %22 = math.tanh %21 : vector<128x1xf32>
    %c0_17 = arith.constant 0 : index
    %c0_18 = arith.constant 0 : index
    %23 = vector.load %arg1[%c0_17, %c0_18] : memref<128x1xf32, #tpu.memory_space<vmem>>, vector<128x1xf32>
    %cst_19 = arith.constant 0.000000e+00 : f32
    %24 = vector.broadcast %cst_19 : f32 to vector<128x1xf32>
    %25 = arith.subf %24, %22 : vector<128x1xf32>
    %26 = math.exp %25 : vector<128x1xf32>
    %cst_20 = arith.constant 5.000000e-01 : f32
    %27 = vector.broadcast %cst_20 : f32 to vector<128x1xf32>
    %28 = arith.mulf %27, %26 : vector<128x1xf32>
    %29 = arith.subf %20, %23 : vector<128x1xf32>
    %30 = arith.mulf %29, %29 : vector<128x1xf32>
    %cst_21 = arith.constant 0.000000e+00 : f32
    %31 = vector.broadcast %cst_21 : f32 to vector<128x1xf32>
    %32 = arith.subf %31, %30 : vector<128x1xf32>
    %33 = arith.mulf %32, %28 : vector<128x1xf32>
    %cst_22 = arith.constant dense<0.000000e+00> : vector<1xf32>
    %34 = vector.multi_reduction <add>, %23, %cst_22 [0] : vector<128x1xf32> to vector<1xf32>
    %35 = vector.shape_cast %34 : vector<1xf32> to vector<1x1xf32>
    %cst_23 = arith.constant 7.812500e-03 : f32
    %36 = vector.broadcast %cst_23 : f32 to vector<1x1xf32>
    %37 = arith.mulf %35, %36 : vector<1x1xf32>
    %38 = arith.mulf %23, %23 : vector<128x1xf32>
    %cst_24 = arith.constant dense<0.000000e+00> : vector<1xf32>
    %39 = vector.multi_reduction <add>, %38, %cst_24 [0] : vector<128x1xf32> to vector<1xf32>
    %40 = vector.shape_cast %39 : vector<1xf32> to vector<1x1xf32>
    %cst_25 = arith.constant 7.812500e-03 : f32
    %41 = vector.broadcast %cst_25 : f32 to vector<1x1xf32>
    %42 = arith.mulf %40, %41 : vector<1x1xf32>
    %cst_26 = arith.constant 2.000000e+00 : f32
    %43 = vector.broadcast %cst_26 : f32 to vector<128x1xf32>
    %44 = arith.mulf %43, %20 : vector<128x1xf32>
    %45 = vector.broadcast %37 : vector<1x1xf32> to vector<128x1xf32>
    %46 = arith.mulf %44, %45 : vector<128x1xf32>
    %47 = vector.broadcast %42 : vector<1x1xf32> to vector<128x1xf32>
    %48 = arith.subf %47, %46 : vector<128x1xf32>
    %49 = arith.mulf %20, %20 : vector<128x1xf32>
    %50 = arith.addf %48, %49 : vector<128x1xf32>
    %cst_27 = arith.constant 0.000000e+00 : f32
    %51 = vector.broadcast %cst_27 : f32 to vector<128x1xf32>
    %52 = arith.subf %51, %50 : vector<128x1xf32>
    %53 = arith.mulf %52, %28 : vector<128x1xf32>
    %54 = arith.subf %33, %53 : vector<128x1xf32>
    %cst_28 = arith.constant dense<0.000000e+00> : vector<128xf32>
    %55 = vector.multi_reduction <add>, %54, %cst_28 [1] : vector<128x1xf32> to vector<128xf32>
    %56 = vector.shape_cast %55 : vector<128xf32> to vector<128x1xf32>
    %cst_29 = arith.constant dense<0.000000e+00> : vector<1xf32>
    %57 = vector.multi_reduction <add>, %56, %cst_29 [0] : vector<128x1xf32> to vector<1xf32>
    %58 = vector.shape_cast %57 : vector<1xf32> to vector<1x1xf32>
    %cst_30 = arith.constant 7.812500e-03 : f32
    %59 = vector.broadcast %cst_30 : f32 to vector<1x1xf32>
    %60 = arith.mulf %58, %59 : vector<1x1xf32>
    %c0_31 = arith.constant 0 : index
    %c0_32 = arith.constant 0 : index
    %61 = vector.load %arg8[%c0_31, %c0_32] : memref<1x1xf32, #tpu.memory_space<vmem>>, vector<1x1xf32>
    tpu.vector_store %arg8[%c0_31, %c0_32], %60 {strides = array<i32>} : memref<1x1xf32, #tpu.memory_space<vmem>>, vector<1x1xf32>,
    return
  }
}

</mosaic_0001>

<llo_original>
// kernel: tpu_custom_call.1
$region0: #{tpu_custom_call.1}
  #allocation0 [shape = 'u32[]', space=smem, size = 0x4, offset = 0x4, fixed_abs, tag = 'smem constant byte address 0x4 - core index']
  #allocation1 [shape = 'u32[72,128]{1,0:T(1,128)}', space=vmem, size = 0x9000, scoped, tag = 'internal scratch']
  %s0 = inlined_call_operand.vmem [shape: f32[128,32], index: 0, kind: input, shape index: {}]
  %s1 = inlined_call_operand.vmem [shape: f32[128,1], index: 1, kind: input, shape index: {}]
  %s2 = inlined_call_operand.vmem [shape: f32[32,128], index: 2, kind: input, shape index: {}]
  %s3 = inlined_call_operand.vmem [shape: f32[1,128], index: 3, kind: input, shape index: {}]
  %s4 = inlined_call_operand.vmem [shape: f32[128,128], index: 4, kind: input, shape index: {}]
  %s5 = inlined_call_operand.vmem [shape: f32[1,128], index: 5, kind: input, shape index: {}]
  %s6 = inlined_call_operand.vmem [shape: f32[128,2], index: 6, kind: input, shape index: {}]
  %s7 = inlined_call_operand.vmem [shape: f32[1,2], index: 7, kind: input, shape index: {}]
  %s8 = inlined_call_operand.hbm [shape: f32[1,1], index: 8, kind: output, shape index: {}]
  %s9 = sld [smem:[#allocation0]]
  $region42: #{tpu_custom_call.1} parent=0
    _
  %s11 = ssub.s32 1, %s9
  %s12 = scalar_select 0, %s11, %s9
  $region1: #{tpu_custom_call.1} parent=0
    #allocation2 [shape = 'u8[512]{0}', space=vmem, size = 0x400, scoped, tag = 'output window, operand 0, single buffered']
    #allocation3 [shape = 's32[1]{0}', space=sflag, size = 0x4, scoped, tag = 'scoped memory for tpu_custom_call.1']
    %13 = vsyncpa [#allocation3], 0
    // Predicated region
    $region2: #{tpu_custom_call.1} parent=1 // pred_check
      _
    $region3: #{tpu_custom_call.1} parent=1 // pred_check_branch
      %15 = sbr.rel (0) target = $region5
    $region4: #{tpu_custom_call.1} parent=1 // pred_region
      _
    $region5: #{tpu_custom_call.1} parent=1 // pred_fallthru
      _
    // Predicated region
    $region6: #{tpu_custom_call.1} parent=1 // pred_check
      _
    $region7: #{tpu_custom_call.1} parent=1 // pred_check_branch
      %17 = sbr.rel (0) target = $region9
    $region8: #{tpu_custom_call.1} parent=1 // pred_region
      _
    $region9: #{tpu_custom_call.1} parent=1 // pred_fallthru
      _
    // Predicated region
    $region10: #{tpu_custom_call.1} parent=1 // pred_check
      _
    $region11: #{tpu_custom_call.1} parent=1 // pred_check_branch
      %19 = sbr.rel (0) target = $region13
    $region12: #{tpu_custom_call.1} parent=1 // pred_region
      _
    $region13: #{tpu_custom_call.1} parent=1 // pred_fallthru
      _
    // Predicated region
    $region14: #{tpu_custom_call.1} parent=1 // pred_check
      _
    $region15: #{tpu_custom_call.1} parent=1 // pred_check_branch
      %21 = sbr.rel (0) target = $region17
    $region16: #{tpu_custom_call.1} parent=1 // pred_region
      _
    $region17: #{tpu_custom_call.1} parent=1 // pred_fallthru
      _
    // Predicated region
    $region18: #{tpu_custom_call.1} parent=1 // pred_check
      _
    $region19: #{tpu_custom_call.1} parent=1 // pred_check_branch
      %23 = sbr.rel (0) target = $region21
    $region20: #{tpu_custom_call.1} parent=1 // pred_region
      _
    $region21: #{tpu_custom_call.1} parent=1 // pred_fallthru
      _
    // Predicated region
    $region22: #{tpu_custom_call.1} parent=1 // pred_check
      _
    $region23: #{tpu_custom_call.1} parent=1 // pred_check_branch
      %25 = sbr.rel (0) target = $region25
    $region24: #{tpu_custom_call.1} parent=1 // pred_region
      _
    $region25: #{tpu_custom_call.1} parent=1 // pred_fallthru
      _
    // Predicated region
    $region26: #{tpu_custom_call.1} parent=1 // pred_check
      _
    $region27: #{tpu_custom_call.1} parent=1 // pred_check_branch
      %27 = sbr.rel (0) target = $region29
    $region28: #{tpu_custom_call.1} parent=1 // pred_region
      _
    $region29: #{tpu_custom_call.1} parent=1 // pred_fallthru
      _
    // Predicated region
    $region30: #{tpu_custom_call.1} parent=1 // pred_check
      _
    $region31: #{tpu_custom_call.1} parent=1 // pred_check_branch
      %29 = sbr.rel (0) target = $region33
    $region32: #{tpu_custom_call.1} parent=1 // pred_region
      _
    $region33: #{tpu_custom_call.1} parent=1 // pred_fallthru
      _
    %v30 = vld [vmem:[%s0] sm:$0xff]
    %v31 = vld [vmem:[%s0 + $0x8] sm:$0xff]
    %v32 = vld [vmem:[%s0 + $0x10] sm:$0xff]
    %v33 = vld [vmem:[%s0 + $0x18] sm:$0xff]
    %v34 = vld [vmem:[%s0 + $0x20] sm:$0xff]
    %v35 = vld [vmem:[%s0 + $0x28] sm:$0xff]
    %v36 = vld [vmem:[%s0 + $0x30] sm:$0xff]
    %v37 = vld [vmem:[%s0 + $0x38] sm:$0xff]
    %v38 = vld [vmem:[%s0 + $0x40] sm:$0xff]
    %v39 = vld [vmem:[%s0 + $0x48] sm:$0xff]
    %v40 = vld [vmem:[%s0 + $0x50] sm:$0xff]
    %v41 = vld [vmem:[%s0 + $0x58] sm:$0xff]
    %v42 = vld [vmem:[%s0 + $0x60] sm:$0xff]
    %v43 = vld [vmem:[%s0 + $0x68] sm:$0xff]
    %v44 = vld [vmem:[%s0 + $0x70] sm:$0xff]
    %v45 = vld [vmem:[%s0 + $0x78] sm:$0xff]
    %v46 = vld [vmem:[%s2] sm:$0xff]
    %v47 = vld [vmem:[%s2 + $0x8] sm:$0xff]
    %v48 = vld [vmem:[%s2 + $0x10] sm:$0xff]
    %v49 = vld [vmem:[%s2 + $0x18] sm:$0xff]
    %v50 = vld [vmem:[%s3] sm:$0x1]
    %v52 = vperm.slane %v50, 0
    %vm54 = vcmask 261120
    %v56 = vsel %vm54, %v30, 0
    %v59 = vsel %vm54, %v31, 0
    %v62 = vsel %vm54, %v32, 0
    %v65 = vsel %vm54, %v33, 0
    %v68 = vsel %vm54, %v34, 0
    %v71 = vsel %vm54, %v35, 0
    %v74 = vsel %vm54, %v36, 0
    %v77 = vsel %vm54, %v37, 0
    %v80 = vsel %vm54, %v38, 0
    %v83 = vsel %vm54, %v39, 0
    %v86 = vsel %vm54, %v40, 0
    %v89 = vsel %vm54, %v41, 0
    %v92 = vsel %vm54, %v42, 0
    %v95 = vsel %vm54, %v43, 0
    %v98 = vsel %vm54, %v44, 0
    %v101 = vsel %vm54, %v45, 0
    %103 = vmatpush.msra.mxu0 0.0
    %104 = vmatpush.msra.mxu0 0.0
    %105 = vmatpush.msra.mxu0 0.0
    %106 = vmatpush.msra.mxu0 0.0
    %107 = vmatpush.msra.mxu0 0.0
    %108 = vmatpush.msra.mxu0 0.0
    %109 = vmatpush.msra.mxu0 0.0
    %110 = vmatpush.msra.mxu0 0.0
    %111 = vmatpush.msra.mxu0 0.0
    %112 = vmatpush.msra.mxu0 0.0
    %113 = vmatpush.msra.mxu0 0.0
    %114 = vmatpush.msra.mxu0 0.0
    %115 = vmatpush.msra.mxu0 %v49
    %116 = vmatpush.msra.mxu0 %v48
    %117 = vmatpush.msra.mxu0 %v47
    %118 = vmatpush.msra.mxu0 %v46
    %119 = vmatmul.f32.gmra.mxu0 %v56
    %v120 = vpop.f32.mrf.mxu0
    %v121 = vadd.f32 %v52, %v120
    %122 = vmatmul.f32.gmra.mxu0 %v59
    %v123 = vpop.f32.mrf.mxu0
    %v124 = vadd.f32 %v52, %v123
    %125 = vmatmul.f32.gmra.mxu0 %v62
    %v126 = vpop.f32.mrf.mxu0
    %v127 = vadd.f32 %v52, %v126
    %128 = vmatmul.f32.gmra.mxu0 %v65
    %v129 = vpop.f32.mrf.mxu0
    %v130 = vadd.f32 %v52, %v129
    %131 = vmatmul.f32.gmra.mxu0 %v68
    %v132 = vpop.f32.mrf.mxu0
    %v133 = vadd.f32 %v52, %v132
    %134 = vmatmul.f32.gmra.mxu0 %v71
    %v135 = vpop.f32.mrf.mxu0
    %v136 = vadd.f32 %v52, %v135
    %137 = vmatmul.f32.gmra.mxu0 %v74
    %v138 = vpop.f32.mrf.mxu0
    %v139 = vadd.f32 %v52, %v138
    %140 = vmatmul.f32.gmra.mxu0 %v77
    %v141 = vpop.f32.mrf.mxu0
    %v142 = vadd.f32 %v52, %v141
    %143 = vmatmul.f32.gmra.mxu0 %v80
    %v144 = vpop.f32.mrf.mxu0
    %v145 = vadd.f32 %v52, %v144
    %146 = vmatmul.f32.gmra.mxu0 %v83
    %v147 = vpop.f32.mrf.mxu0
    %v148 = vadd.f32 %v52, %v147
    %149 = vmatmul.f32.gmra.mxu0 %v86
    %v150 = vpop.f32.mrf.mxu0
    %v151 = vadd.f32 %v52, %v150
    %152 = vmatmul.f32.gmra.mxu0 %v89
    %v153 = vpop.f32.mrf.mxu0
    %v154 = vadd.f32 %v52, %v153
    %155 = vmatmul.f32.gmra.mxu0 %v92
    %v156 = vpop.f32.mrf.mxu0
    %v157 = vadd.f32 %v52, %v156
    %158 = vmatmul.f32.gmra.mxu0 %v95
    %v159 = vpop.f32.mrf.mxu0
    %v160 = vadd.f32 %v52, %v159
    %161 = vmatmul.f32.gmra.mxu0 %v98
    %v162 = vpop.f32.mrf.mxu0
    %v163 = vadd.f32 %v52, %v162
    %164 = vmatmul.f32.gmra.mxu0 %v101
    %v165 = vpop.f32.mrf.mxu0
    %v166 = vadd.f32 %v52, %v165
    %167 = vdwg.mxu0
    %v168 = vmax.f32 %v121, 0.0
    %v169 = vmax.f32 %v124, 0.0
    %v170 = vmax.f32 %v127, 0.0
    %v171 = vmax.f32 %v130, 0.0
    %v172 = vmax.f32 %v133, 0.0
    %v173 = vmax.f32 %v136, 0.0
    %v174 = vmax.f32 %v139, 0.0
    %v175 = vmax.f32 %v142, 0.0
    %v176 = vmax.f32 %v145, 0.0
    %v177 = vmax.f32 %v148, 0.0
    %v178 = vmax.f32 %v151, 0.0
    %v179 = vmax.f32 %v154, 0.0
    %v180 = vmax.f32 %v157, 0.0
    %v181 = vmax.f32 %v160, 0.0
    %v182 = vmax.f32 %v163, 0.0
    %v183 = vmax.f32 %v166, 0.0
    %v184 = vld [vmem:[%s4] sm:$0xff]
    %v185 = vld [vmem:[%s4 + $0x8] sm:$0xff]
    %v186 = vld [vmem:[%s4 + $0x10] sm:$0xff]
    %v187 = vld [vmem:[%s4 + $0x18] sm:$0xff]
    %v188 = vld [vmem:[%s4 + $0x20] sm:$0xff]
    %v189 = vld [vmem:[%s4 + $0x28] sm:$0xff]
    %v190 = vld [vmem:[%s4 + $0x30] sm:$0xff]
    %v191 = vld [vmem:[%s4 + $0x38] sm:$0xff]
    %v192 = vld [vmem:[%s4 + $0x40] sm:$0xff]
    %v193 = vld [vmem:[%s4 + $0x48] sm:$0xff]
    %v194 = vld [vmem:[%s4 + $0x50] sm:$0xff]
    %v195 = vld [vmem:[%s4 + $0x58] sm:$0xff]
    %v196 = vld [vmem:[%s4 + $0x60] sm:$0xff]
    %v197 = vld [vmem:[%s4 + $0x68] sm:$0xff]
    %v198 = vld [vmem:[%s4 + $0x70] sm:$0xff]
    %v199 = vld [vmem:[%s4 + $0x78] sm:$0xff]
    %v200 = vld [vmem:[%s5] sm:$0x1]
    %v202 = vperm.slane %v200, 0
    %204 = vmatpush.msra.mxu0 %v199
    %205 = vmatpush.msra.mxu0 %v198
    %206 = vmatpush.msra.mxu0 %v197
    %207 = vmatpush.msra.mxu0 %v196
    %208 = vmatpush.msra.mxu0 %v195
    %209 = vmatpush.msra.mxu0 %v194
    %210 = vmatpush.msra.mxu0 %v193
    %211 = vmatpush.msra.mxu0 %v192
    %212 = vmatpush.msra.mxu0 %v191
    %213 = vmatpush.msra.mxu0 %v190
    %214 = vmatpush.msra.mxu0 %v189
    %215 = vmatpush.msra.mxu0 %v188
    %216 = vmatpush.msra.mxu0 %v187
    %217 = vmatpush.msra.mxu0 %v186
    %218 = vmatpush.msra.mxu0 %v185
    %219 = vmatpush.msra.mxu0 %v184
    %220 = vmatmul.f32.gmra.mxu0 %v168
    %v221 = vpop.f32.mrf.mxu0
    %v222 = vadd.f32 %v202, %v221
    %223 = vmatmul.f32.gmra.mxu0 %v169
    %v224 = vpop.f32.mrf.mxu0
    %v225 = vadd.f32 %v202, %v224
    %226 = vmatmul.f32.gmra.mxu0 %v170
    %v227 = vpop.f32.mrf.mxu0
    %v228 = vadd.f32 %v202, %v227
    %229 = vmatmul.f32.gmra.mxu0 %v171
    %v230 = vpop.f32.mrf.mxu0
    %v231 = vadd.f32 %v202, %v230
    %232 = vmatmul.f32.gmra.mxu0 %v172
    %v233 = vpop.f32.mrf.mxu0
    %v234 = vadd.f32 %v202, %v233
    %235 = vmatmul.f32.gmra.mxu0 %v173
    %v236 = vpop.f32.mrf.mxu0
    %v237 = vadd.f32 %v202, %v236
    %238 = vmatmul.f32.gmra.mxu0 %v174
    %v239 = vpop.f32.mrf.mxu0
    %v240 = vadd.f32 %v202, %v239
    %241 = vmatmul.f32.gmra.mxu0 %v175
    %v242 = vpop.f32.mrf.mxu0
    %v243 = vadd.f32 %v202, %v242
    %244 = vmatmul.f32.gmra.mxu0 %v176
    %v245 = vpop.f32.mrf.mxu0
    %v246 = vadd.f32 %v202, %v245
    %247 = vmatmul.f32.gmra.mxu0 %v177
    %v248 = vpop.f32.mrf.mxu0
    %v249 = vadd.f32 %v202, %v248
    %250 = vmatmul.f32.gmra.mxu0 %v178
    %v251 = vpop.f32.mrf.mxu0
    %v252 = vadd.f32 %v202, %v251
    %253 = vmatmul.f32.gmra.mxu0 %v179
    %v254 = vpop.f32.mrf.mxu0
    %v255 = vadd.f32 %v202, %v254
    %256 = vmatmul.f32.gmra.mxu0 %v180
    %v257 = vpop.f32.mrf.mxu0
    %v258 = vadd.f32 %v202, %v257
    %259 = vmatmul.f32.gmra.mxu0 %v181
    %v260 = vpop.f32.mrf.mxu0
    %v261 = vadd.f32 %v202, %v260
    %262 = vmatmul.f32.gmra.mxu0 %v182
    %v263 = vpop.f32.mrf.mxu0
    %v264 = vadd.f32 %v202, %v263
    %265 = vmatmul.f32.gmra.mxu0 %v183
    %v266 = vpop.f32.mrf.mxu0
    %v267 = vadd.f32 %v202, %v266
    %268 = vdwg.mxu0
    %v269 = vmax.f32 %v222, 0.0
    %v270 = vmax.f32 %v225, 0.0
    %v271 = vmax.f32 %v228, 0.0
    %v272 = vmax.f32 %v231, 0.0
    %v273 = vmax.f32 %v234, 0.0
    %v274 = vmax.f32 %v237, 0.0
    %v275 = vmax.f32 %v240, 0.0
    %v276 = vmax.f32 %v243, 0.0
    %v277 = vmax.f32 %v246, 0.0
    %v278 = vmax.f32 %v249, 0.0
    %v279 = vmax.f32 %v252, 0.0
    %v280 = vmax.f32 %v255, 0.0
    %v281 = vmax.f32 %v258, 0.0
    %v282 = vmax.f32 %v261, 0.0
    %v283 = vmax.f32 %v264, 0.0
    %v284 = vmax.f32 %v267, 0.0
    %v285 = vld [vmem:[%s6] sm:$0xff]
    %v286 = vld [vmem:[%s6 + $0x8] sm:$0xff]
    %v287 = vld [vmem:[%s6 + $0x10] sm:$0xff]
    %v288 = vld [vmem:[%s6 + $0x18] sm:$0xff]
    %v289 = vld [vmem:[%s6 + $0x20] sm:$0xff]
    %v290 = vld [vmem:[%s6 + $0x28] sm:$0xff]
    %v291 = vld [vmem:[%s6 + $0x30] sm:$0xff]
    %v292 = vld [vmem:[%s6 + $0x38] sm:$0xff]
    %v293 = vld [vmem:[%s6 + $0x40] sm:$0xff]
    %v294 = vld [vmem:[%s6 + $0x48] sm:$0xff]
    %v295 = vld [vmem:[%s6 + $0x50] sm:$0xff]
    %v296 = vld [vmem:[%s6 + $0x58] sm:$0xff]
    %v297 = vld [vmem:[%s6 + $0x60] sm:$0xff]
    %v298 = vld [vmem:[%s6 + $0x68] sm:$0xff]
    %v299 = vld [vmem:[%s6 + $0x70] sm:$0xff]
    %v300 = vld [vmem:[%s6 + $0x78] sm:$0xff]
    %v301 = vld [vmem:[%s7] sm:$0x1]
    %v303 = vperm.slane %v301, 0
    %305 = vmatpush.msra.mxu0 %v300
    %306 = vmatpush.msra.mxu0 %v299
    %307 = vmatpush.msra.mxu0 %v298
    %308 = vmatpush.msra.mxu0 %v297
    %309 = vmatpush.msra.mxu0 %v296
    %310 = vmatpush.msra.mxu0 %v295
    %311 = vmatpush.msra.mxu0 %v294
    %312 = vmatpush.msra.mxu0 %v293
    %313 = vmatpush.msra.mxu0 %v292
    %314 = vmatpush.msra.mxu0 %v291
    %315 = vmatpush.msra.mxu0 %v290
    %316 = vmatpush.msra.mxu0 %v289
    %317 = vmatpush.msra.mxu0 %v288
    %318 = vmatpush.msra.mxu0 %v287
    %319 = vmatpush.msra.mxu0 %v286
    %320 = vmatpush.msra.mxu0 %v285
    %321 = vmatmul.f32.gmra.mxu0 %v269
    %v322 = vpop.f32.mrf.mxu0
    %v323 = vadd.f32 %v303, %v322
    %324 = vmatmul.f32.gmra.mxu0 %v270
    %v325 = vpop.f32.mrf.mxu0
    %v326 = vadd.f32 %v303, %v325
    %327 = vmatmul.f32.gmra.mxu0 %v271
    %v328 = vpop.f32.mrf.mxu0
    %v329 = vadd.f32 %v303, %v328
    %330 = vmatmul.f32.gmra.mxu0 %v272
    %v331 = vpop.f32.mrf.mxu0
    %v332 = vadd.f32 %v303, %v331
    %333 = vmatmul.f32.gmra.mxu0 %v273
    %v334 = vpop.f32.mrf.mxu0
    %v335 = vadd.f32 %v303, %v334
    %336 = vmatmul.f32.gmra.mxu0 %v274
    %v337 = vpop.f32.mrf.mxu0
    %v338 = vadd.f32 %v303, %v337
    %339 = vmatmul.f32.gmra.mxu0 %v275
    %v340 = vpop.f32.mrf.mxu0
    %v341 = vadd.f32 %v303, %v340
    %342 = vmatmul.f32.gmra.mxu0 %v276
    %v343 = vpop.f32.mrf.mxu0
    %v344 = vadd.f32 %v303, %v343
    %345 = vmatmul.f32.gmra.mxu0 %v277
    %v346 = vpop.f32.mrf.mxu0
    %v347 = vadd.f32 %v303, %v346
    %348 = vmatmul.f32.gmra.mxu0 %v278
    %v349 = vpop.f32.mrf.mxu0
    %v350 = vadd.f32 %v303, %v349
    %351 = vmatmul.f32.gmra.mxu0 %v279
    %v352 = vpop.f32.mrf.mxu0
    %v353 = vadd.f32 %v303, %v352
    %354 = vmatmul.f32.gmra.mxu0 %v280
    %v355 = vpop.f32.mrf.mxu0
    %v356 = vadd.f32 %v303, %v355
    %357 = vmatmul.f32.gmra.mxu0 %v281
    %v358 = vpop.f32.mrf.mxu0
    %v359 = vadd.f32 %v303, %v358
    %360 = vmatmul.f32.gmra.mxu0 %v282
    %v361 = vpop.f32.mrf.mxu0
    %v362 = vadd.f32 %v303, %v361
    %363 = vmatmul.f32.gmra.mxu0 %v283
    %v364 = vpop.f32.mrf.mxu0
    %v365 = vadd.f32 %v303, %v364
    %366 = vmatmul.f32.gmra.mxu0 %v284
    %v367 = vpop.f32.mrf.mxu0
    %v368 = vadd.f32 %v303, %v367
    %369 = vdwg.mxu0
    %v370 = vtanh.pop %v323
    %v371 = vtanh.pop %v326
    %v372 = vtanh.pop %v329
    %v373 = vtanh.pop %v332
    %v374 = vtanh.pop %v335
    %v375 = vtanh.pop %v338
    %v376 = vtanh.pop %v341
    %v377 = vtanh.pop %v344
    %v378 = vtanh.pop %v347
    %v379 = vtanh.pop %v350
    %v380 = vtanh.pop %v353
    %v381 = vtanh.pop %v356
    %v382 = vtanh.pop %v359
    %v383 = vtanh.pop %v362
    %v384 = vtanh.pop %v365
    %v385 = vtanh.pop %v368
    %v386 = vld [vmem:[%s1] sm:$0xff]
    %v387 = vld [vmem:[%s1 + $0x8] sm:$0xff]
    %v388 = vld [vmem:[%s1 + $0x10] sm:$0xff]
    %v389 = vld [vmem:[%s1 + $0x18] sm:$0xff]
    %v390 = vld [vmem:[%s1 + $0x20] sm:$0xff]
    %v391 = vld [vmem:[%s1 + $0x28] sm:$0xff]
    %v392 = vld [vmem:[%s1 + $0x30] sm:$0xff]
    %v393 = vld [vmem:[%s1 + $0x38] sm:$0xff]
    %v394 = vld [vmem:[%s1 + $0x40] sm:$0xff]
    %v395 = vld [vmem:[%s1 + $0x48] sm:$0xff]
    %v396 = vld [vmem:[%s1 + $0x50] sm:$0xff]
    %v397 = vld [vmem:[%s1 + $0x58] sm:$0xff]
    %v398 = vld [vmem:[%s1 + $0x60] sm:$0xff]
    %v399 = vld [vmem:[%s1 + $0x68] sm:$0xff]
    %v400 = vld [vmem:[%s1 + $0x70] sm:$0xff]
    %v401 = vld [vmem:[%s1 + $0x78] sm:$0xff]
    %v402 = vsub.f32 0.0, %v370
    %v403 = vsub.f32 0.0, %v371
    %v404 = vsub.f32 0.0, %v372
    %v405 = vsub.f32 0.0, %v373
    %v406 = vsub.f32 0.0, %v374
    %v407 = vsub.f32 0.0, %v375
    %v408 = vsub.f32 0.0, %v376
    %v409 = vsub.f32 0.0, %v377
    %v410 = vsub.f32 0.0, %v378
    %v411 = vsub.f32 0.0, %v379
    %v412 = vsub.f32 0.0, %v380
    %v413 = vsub.f32 0.0, %v381
    %v414 = vsub.f32 0.0, %v382
    %v415 = vsub.f32 0.0, %v383
    %v416 = vsub.f32 0.0, %v384
    %v417 = vsub.f32 0.0, %v385
    %v418 = vmul.f32 %v402, 1.442695
    %v419 = vpow.pop %v418
    %v420 = vmul.f32 %v403, 1.442695
    %v421 = vpow.pop %v420
    %v422 = vmul.f32 %v404, 1.442695
    %v423 = vpow.pop %v422
    %v424 = vmul.f32 %v405, 1.442695
    %v425 = vpow.pop %v424
    %v426 = vmul.f32 %v406, 1.442695
    %v427 = vpow.pop %v426
    %v428 = vmul.f32 %v407, 1.442695
    %v429 = vpow.pop %v428
    %v430 = vmul.f32 %v408, 1.442695
    %v431 = vpow.pop %v430
    %v432 = vmul.f32 %v409, 1.442695
    %v433 = vpow.pop %v432
    %v434 = vmul.f32 %v410, 1.442695
    %v435 = vpow.pop %v434
    %v436 = vmul.f32 %v411, 1.442695
    %v437 = vpow.pop %v436
    %v438 = vmul.f32 %v412, 1.442695
    %v439 = vpow.pop %v438
    %v440 = vmul.f32 %v413, 1.442695
    %v441 = vpow.pop %v440
    %v442 = vmul.f32 %v414, 1.442695
    %v443 = vpow.pop %v442
    %v444 = vmul.f32 %v415, 1.442695
    %v445 = vpow.pop %v444
    %v446 = vmul.f32 %v416, 1.442695
    %v447 = vpow.pop %v446
    %v448 = vmul.f32 %v417, 1.442695
    %v449 = vpow.pop %v448
    %v450 = vmul.f32 %v419, 0.5
    %v451 = vmul.f32 %v421, 0.5
    %v452 = vmul.f32 %v423, 0.5
    %v453 = vmul.f32 %v425, 0.5
    %v454 = vmul.f32 %v427, 0.5
    %v455 = vmul.f32 %v429, 0.5
    %v456 = vmul.f32 %v431, 0.5
    %v457 = vmul.f32 %v433, 0.5
    %v458 = vmul.f32 %v435, 0.5
    %v459 = vmul.f32 %v437, 0.5
    %v460 = vmul.f32 %v439, 0.5
    %v461 = vmul.f32 %v441, 0.5
    %v462 = vmul.f32 %v443, 0.5
    %v463 = vmul.f32 %v445, 0.5
    %v464 = vmul.f32 %v447, 0.5
    %v465 = vmul.f32 %v449, 0.5
    %v466 = vsub.f32 %v323, %v386
    %v467 = vsub.f32 %v326, %v387
    %v468 = vsub.f32 %v329, %v388
    %v469 = vsub.f32 %v332, %v389
    %v470 = vsub.f32 %v335, %v390
    %v471 = vsub.f32 %v338, %v391
    %v472 = vsub.f32 %v341, %v392
    %v473 = vsub.f32 %v344, %v393
    %v474 = vsub.f32 %v347, %v394
    %v475 = vsub.f32 %v350, %v395
    %v476 = vsub.f32 %v353, %v396
    %v477 = vsub.f32 %v356, %v397
    %v478 = vsub.f32 %v359, %v398
    %v479 = vsub.f32 %v362, %v399
    %v480 = vsub.f32 %v365, %v400
    %v481 = vsub.f32 %v368, %v401
    %v482 = vmul.f32 %v466, %v466
    %v483 = vmul.f32 %v467, %v467
    %v484 = vmul.f32 %v468, %v468
    %v485 = vmul.f32 %v469, %v469
    %v486 = vmul.f32 %v470, %v470
    %v487 = vmul.f32 %v471, %v471
    %v488 = vmul.f32 %v472, %v472
    %v489 = vmul.f32 %v473, %v473
    %v490 = vmul.f32 %v474, %v474
    %v491 = vmul.f32 %v475, %v475
    %v492 = vmul.f32 %v476, %v476
    %v493 = vmul.f32 %v477, %v477
    %v494 = vmul.f32 %v478, %v478
    %v495 = vmul.f32 %v479, %v479
    %v496 = vmul.f32 %v480, %v480
    %v497 = vmul.f32 %v481, %v481
    %v498 = vsub.f32 0.0, %v482
    %v499 = vsub.f32 0.0, %v483
    %v500 = vsub.f32 0.0, %v484
    %v501 = vsub.f32 0.0, %v485
    %v502 = vsub.f32 0.0, %v486
    %v503 = vsub.f32 0.0, %v487
    %v504 = vsub.f32 0.0, %v488
    %v505 = vsub.f32 0.0, %v489
    %v506 = vsub.f32 0.0, %v490
    %v507 = vsub.f32 0.0, %v491
    %v508 = vsub.f32 0.0, %v492
    %v509 = vsub.f32 0.0, %v493
    %v510 = vsub.f32 0.0, %v494
    %v511 = vsub.f32 0.0, %v495
    %v512 = vsub.f32 0.0, %v496
    %v513 = vsub.f32 0.0, %v497
    %530 = vrot.lane.b32.xlu0 %v450, 127
    %v531 = vpop.permute.xlu0 %530
    %532 = vrot.lane.b32.xlu0 %v451, 127
    %v533 = vpop.permute.xlu0 %532
    %534 = vrot.lane.b32.xlu0 %v452, 127
    %v535 = vpop.permute.xlu0 %534
    %536 = vrot.lane.b32.xlu0 %v453, 127
    %v537 = vpop.permute.xlu0 %536
    %538 = vrot.lane.b32.xlu0 %v454, 127
    %v539 = vpop.permute.xlu0 %538
    %540 = vrot.lane.b32.xlu0 %v455, 127
    %v541 = vpop.permute.xlu0 %540
    %542 = vrot.lane.b32.xlu0 %v456, 127
    %v543 = vpop.permute.xlu0 %542
    %544 = vrot.lane.b32.xlu0 %v457, 127
    %v545 = vpop.permute.xlu0 %544
    %546 = vrot.lane.b32.xlu0 %v458, 127
    %v547 = vpop.permute.xlu0 %546
    %548 = vrot.lane.b32.xlu0 %v459, 127
    %v549 = vpop.permute.xlu0 %548
    %550 = vrot.lane.b32.xlu0 %v460, 127
    %v551 = vpop.permute.xlu0 %550
    %552 = vrot.lane.b32.xlu0 %v461, 127
    %v553 = vpop.permute.xlu0 %552
    %554 = vrot.lane.b32.xlu0 %v462, 127
    %v555 = vpop.permute.xlu0 %554
    %556 = vrot.lane.b32.xlu0 %v463, 127
    %v557 = vpop.permute.xlu0 %556
    %558 = vrot.lane.b32.xlu0 %v464, 127
    %v559 = vpop.permute.xlu0 %558
    %560 = vrot.lane.b32.xlu0 %v465, 127
    %v561 = vpop.permute.xlu0 %560
    %v578 = vmul.f32 %v498, %v531
    %v579 = vmul.f32 %v499, %v533
    %v580 = vmul.f32 %v500, %v535
    %v581 = vmul.f32 %v501, %v537
    %v582 = vmul.f32 %v502, %v539
    %v583 = vmul.f32 %v503, %v541
    %v584 = vmul.f32 %v504, %v543
    %v585 = vmul.f32 %v505, %v545
    %v586 = vmul.f32 %v506, %v547
    %v587 = vmul.f32 %v507, %v549
    %v588 = vmul.f32 %v508, %v551
    %v589 = vmul.f32 %v509, %v553
    %v590 = vmul.f32 %v510, %v555
    %v591 = vmul.f32 %v511, %v557
    %v592 = vmul.f32 %v512, %v559
    %v593 = vmul.f32 %v513, %v561
    %vm594 = vcmask 7168
    %v595 = vsel %vm594, %v386, 0.0
    %v596 = vsel %vm594, %v387, 0.0
    %v597 = vadd.f32 %v595, %v596
    %v598 = vsel %vm594, %v388, 0.0
    %v599 = vadd.f32 %v597, %v598
    %v600 = vsel %vm594, %v389, 0.0
    %v601 = vadd.f32 %v599, %v600
    %v602 = vsel %vm594, %v390, 0.0
    %v603 = vadd.f32 %v601, %v602
    %v604 = vsel %vm594, %v391, 0.0
    %v605 = vadd.f32 %v603, %v604
    %v606 = vsel %vm594, %v392, 0.0
    %v607 = vadd.f32 %v605, %v606
    %v608 = vsel %vm594, %v393, 0.0
    %v609 = vadd.f32 %v607, %v608
    %v610 = vsel %vm594, %v394, 0.0
    %v611 = vadd.f32 %v609, %v610
    %v612 = vsel %vm594, %v395, 0.0
    %v613 = vadd.f32 %v611, %v612
    %v614 = vsel %vm594, %v396, 0.0
    %v615 = vadd.f32 %v613, %v614
    %v616 = vsel %vm594, %v397, 0.0
    %v617 = vadd.f32 %v615, %v616
    %v618 = vsel %vm594, %v398, 0.0
    %v619 = vadd.f32 %v617, %v618
    %v620 = vsel %vm594, %v399, 0.0
    %v621 = vadd.f32 %v619, %v620
    %v622 = vsel %vm594, %v400, 0.0
    %v623 = vadd.f32 %v621, %v622
    %v624 = vsel %vm594, %v401, 0.0
    %v625 = vadd.f32 %v623, %v624
    %v626 = vrot.slane %v625, 4
    %v627 = vadd.f32 %v625, %v626
    %v628 = vrot.slane %v627, 2
    %v629 = vadd.f32 %v627, %v628
    %v630 = vrot.slane %v629, 1
    %v631 = vadd.f32 %v629, %v630
    %v632 = vmul.f32 %v631, 0.0078125
    %v633 = vmul.f32 %v386, %v386
    %v634 = vmul.f32 %v387, %v387
    %v635 = vmul.f32 %v388, %v388
    %v636 = vmul.f32 %v389, %v389
    %v637 = vmul.f32 %v390, %v390
    %v638 = vmul.f32 %v391, %v391
    %v639 = vmul.f32 %v392, %v392
    %v640 = vmul.f32 %v393, %v393
    %v641 = vmul.f32 %v394, %v394
    %v642 = vmul.f32 %v395, %v395
    %v643 = vmul.f32 %v396, %v396
    %v644 = vmul.f32 %v397, %v397
    %v645 = vmul.f32 %v398, %v398
    %v646 = vmul.f32 %v399, %v399
    %v647 = vmul.f32 %v400, %v400
    %v648 = vmul.f32 %v401, %v401
    %v649 = vsel %vm594, %v633, 0.0
    %v650 = vsel %vm594, %v634, 0.0
    %v651 = vadd.f32 %v649, %v650
    %v652 = vsel %vm594, %v635, 0.0
    %v653 = vadd.f32 %v651, %v652
    %v654 = vsel %vm594, %v636, 0.0
    %v655 = vadd.f32 %v653, %v654
    %v656 = vsel %vm594, %v637, 0.0
    %v657 = vadd.f32 %v655, %v656
    %v658 = vsel %vm594, %v638, 0.0
    %v659 = vadd.f32 %v657, %v658
    %v660 = vsel %vm594, %v639, 0.0
    %v661 = vadd.f32 %v659, %v660
    %v662 = vsel %vm594, %v640, 0.0
    %v663 = vadd.f32 %v661, %v662
    %v664 = vsel %vm594, %v641, 0.0
    %v665 = vadd.f32 %v663, %v664
    %v666 = vsel %vm594, %v642, 0.0
    %v667 = vadd.f32 %v665, %v666
    %v668 = vsel %vm594, %v643, 0.0
    %v669 = vadd.f32 %v667, %v668
    %v670 = vsel %vm594, %v644, 0.0
    %v671 = vadd.f32 %v669, %v670
    %v672 = vsel %vm594, %v645, 0.0
    %v673 = vadd.f32 %v671, %v672
    %v674 = vsel %vm594, %v646, 0.0
    %v675 = vadd.f32 %v673, %v674
    %v676 = vsel %vm594, %v647, 0.0
    %v677 = vadd.f32 %v675, %v676
    %v678 = vsel %vm594, %v648, 0.0
    %v679 = vadd.f32 %v677, %v678
    %v680 = vrot.slane %v679, 4
    %v681 = vadd.f32 %v679, %v680
    %v682 = vrot.slane %v681, 2
    %v683 = vadd.f32 %v681, %v682
    %v684 = vrot.slane %v683, 1
    %v685 = vadd.f32 %v683, %v684
    %v686 = vmul.f32 %v685, 0.0078125
    %v687 = vmul.f32 %v323, 2.0
    %v688 = vmul.f32 %v326, 2.0
    %v689 = vmul.f32 %v329, 2.0
    %v690 = vmul.f32 %v332, 2.0
    %v691 = vmul.f32 %v335, 2.0
    %v692 = vmul.f32 %v338, 2.0
    %v693 = vmul.f32 %v341, 2.0
    %v694 = vmul.f32 %v344, 2.0
    %v695 = vmul.f32 %v347, 2.0
    %v696 = vmul.f32 %v350, 2.0
    %v697 = vmul.f32 %v353, 2.0
    %v698 = vmul.f32 %v356, 2.0
    %v699 = vmul.f32 %v359, 2.0
    %v700 = vmul.f32 %v362, 2.0
    %v701 = vmul.f32 %v365, 2.0
    %v702 = vmul.f32 %v368, 2.0
    %v703 = vmul.f32 %v687, %v632
    %v704 = vmul.f32 %v688, %v632
    %v705 = vmul.f32 %v689, %v632
    %v706 = vmul.f32 %v690, %v632
    %v707 = vmul.f32 %v691, %v632
    %v708 = vmul.f32 %v692, %v632
    %v709 = vmul.f32 %v693, %v632
    %v710 = vmul.f32 %v694, %v632
    %v711 = vmul.f32 %v695, %v632
    %v712 = vmul.f32 %v696, %v632
    %v713 = vmul.f32 %v697, %v632
    %v714 = vmul.f32 %v698, %v632
    %v715 = vmul.f32 %v699, %v632
    %v716 = vmul.f32 %v700, %v632
    %v717 = vmul.f32 %v701, %v632
    %v718 = vmul.f32 %v702, %v632
    %v719 = vsub.f32 %v686, %v703
    %v720 = vsub.f32 %v686, %v704
    %v721 = vsub.f32 %v686, %v705
    %v722 = vsub.f32 %v686, %v706
    %v723 = vsub.f32 %v686, %v707
    %v724 = vsub.f32 %v686, %v708
    %v725 = vsub.f32 %v686, %v709
    %v726 = vsub.f32 %v686, %v710
    %v727 = vsub.f32 %v686, %v711
    %v728 = vsub.f32 %v686, %v712
    %v729 = vsub.f32 %v686, %v713
    %v730 = vsub.f32 %v686, %v714
    %v731 = vsub.f32 %v686, %v715
    %v732 = vsub.f32 %v686, %v716
    %v733 = vsub.f32 %v686, %v717
    %v734 = vsub.f32 %v686, %v718
    %v735 = vmul.f32 %v323, %v323
    %v736 = vmul.f32 %v326, %v326
    %v737 = vmul.f32 %v329, %v329
    %v738 = vmul.f32 %v332, %v332
    %v739 = vmul.f32 %v335, %v335
    %v740 = vmul.f32 %v338, %v338
    %v741 = vmul.f32 %v341, %v341
    %v742 = vmul.f32 %v344, %v344
    %v743 = vmul.f32 %v347, %v347
    %v744 = vmul.f32 %v350, %v350
    %v745 = vmul.f32 %v353, %v353
    %v746 = vmul.f32 %v356, %v356
    %v747 = vmul.f32 %v359, %v359
    %v748 = vmul.f32 %v362, %v362
    %v749 = vmul.f32 %v365, %v365
    %v750 = vmul.f32 %v368, %v368
    %v751 = vadd.f32 %v719, %v735
    %v752 = vadd.f32 %v720, %v736
    %v753 = vadd.f32 %v721, %v737
    %v754 = vadd.f32 %v722, %v738
    %v755 = vadd.f32 %v723, %v739
    %v756 = vadd.f32 %v724, %v740
    %v757 = vadd.f32 %v725, %v741
    %v758 = vadd.f32 %v726, %v742
    %v759 = vadd.f32 %v727, %v743
    %v760 = vadd.f32 %v728, %v744
    %v761 = vadd.f32 %v729, %v745
    %v762 = vadd.f32 %v730, %v746
    %v763 = vadd.f32 %v731, %v747
    %v764 = vadd.f32 %v732, %v748
    %v765 = vadd.f32 %v733, %v749
    %v766 = vadd.f32 %v734, %v750
    %v767 = vsub.f32 0.0, %v751
    %v768 = vsub.f32 0.0, %v752
    %v769 = vsub.f32 0.0, %v753
    %v770 = vsub.f32 0.0, %v754
    %v771 = vsub.f32 0.0, %v755
    %v772 = vsub.f32 0.0, %v756
    %v773 = vsub.f32 0.0, %v757
    %v774 = vsub.f32 0.0, %v758
    %v775 = vsub.f32 0.0, %v759
    %v776 = vsub.f32 0.0, %v760
    %v777 = vsub.f32 0.0, %v761
    %v778 = vsub.f32 0.0, %v762
    %v779 = vsub.f32 0.0, %v763
    %v780 = vsub.f32 0.0, %v764
    %v781 = vsub.f32 0.0, %v765
    %v782 = vsub.f32 0.0, %v766
    %v783 = vmul.f32 %v767, %v531
    %v784 = vmul.f32 %v768, %v533
    %v785 = vmul.f32 %v769, %v535
    %v786 = vmul.f32 %v770, %v537
    %v787 = vmul.f32 %v771, %v539
    %v788 = vmul.f32 %v772, %v541
    %v789 = vmul.f32 %v773, %v543
    %v790 = vmul.f32 %v774, %v545
    %v791 = vmul.f32 %v775, %v547
    %v792 = vmul.f32 %v776, %v549
    %v793 = vmul.f32 %v777, %v551
    %v794 = vmul.f32 %v778, %v553
    %v795 = vmul.f32 %v779, %v555
    %v796 = vmul.f32 %v780, %v557
    %v797 = vmul.f32 %v781, %v559
    %v798 = vmul.f32 %v782, %v561
    %v799 = vsub.f32 %v578, %v783
    %v800 = vsub.f32 %v579, %v784
    %v801 = vsub.f32 %v580, %v785
    %v802 = vsub.f32 %v581, %v786
    %v803 = vsub.f32 %v582, %v787
    %v804 = vsub.f32 %v583, %v788
    %v805 = vsub.f32 %v584, %v789
    %v806 = vsub.f32 %v585, %v790
    %v807 = vsub.f32 %v586, %v791
    %v808 = vsub.f32 %v587, %v792
    %v809 = vsub.f32 %v588, %v793
    %v810 = vsub.f32 %v589, %v794
    %v811 = vsub.f32 %v590, %v795
    %v812 = vsub.f32 %v591, %v796
    %v813 = vsub.f32 %v592, %v797
    %v814 = vsub.f32 %v593, %v798
    %v815 = vadd.f32 %v799, 0.0
    %v816 = vadd.f32 %v800, 0.0
    %v817 = vadd.f32 %v801, 0.0
    %v818 = vadd.f32 %v802, 0.0
    %v819 = vadd.f32 %v803, 0.0
    %v820 = vadd.f32 %v804, 0.0
    %v821 = vadd.f32 %v805, 0.0
    %v822 = vadd.f32 %v806, 0.0
    %v823 = vadd.f32 %v807, 0.0
    %v824 = vadd.f32 %v808, 0.0
    %v825 = vadd.f32 %v809, 0.0
    %v826 = vadd.f32 %v810, 0.0
    %v827 = vadd.f32 %v811, 0.0
    %v828 = vadd.f32 %v812, 0.0
    %v829 = vadd.f32 %v813, 0.0
    %v830 = vadd.f32 %v814, 0.0
    %v831 = vsel %vm594, %v815, 0.0
    %v832 = vsel %vm594, %v816, 0.0
    %v833 = vadd.f32 %v831, %v832
    %v834 = vsel %vm594, %v817, 0.0
    %v835 = vadd.f32 %v833, %v834
    %v836 = vsel %vm594, %v818, 0.0
    %v837 = vadd.f32 %v835, %v836
    %v838 = vsel %vm594, %v819, 0.0
    %v839 = vadd.f32 %v837, %v838
    %v840 = vsel %vm594, %v820, 0.0
    %v841 = vadd.f32 %v839, %v840
    %v842 = vsel %vm594, %v821, 0.0
    %v843 = vadd.f32 %v841, %v842
    %v844 = vsel %vm594, %v822, 0.0
    %v845 = vadd.f32 %v843, %v844
    %v846 = vsel %vm594, %v823, 0.0
    %v847 = vadd.f32 %v845, %v846
    %v848 = vsel %vm594, %v824, 0.0
    %v849 = vadd.f32 %v847, %v848
    %v850 = vsel %vm594, %v825, 0.0
    %v851 = vadd.f32 %v849, %v850
    %v852 = vsel %vm594, %v826, 0.0
    %v853 = vadd.f32 %v851, %v852
    %v854 = vsel %vm594, %v827, 0.0
    %v855 = vadd.f32 %v853, %v854
    %v856 = vsel %vm594, %v828, 0.0
    %v857 = vadd.f32 %v855, %v856
    %v858 = vsel %vm594, %v829, 0.0
    %v859 = vadd.f32 %v857, %v858
    %v860 = vsel %vm594, %v830, 0.0
    %v861 = vadd.f32 %v859, %v860
    %v862 = vrot.slane %v861, 4
    %v863 = vadd.f32 %v861, %v862
    %v864 = vrot.slane %v863, 2
    %v865 = vadd.f32 %v863, %v864
    %v866 = vrot.slane %v865, 1
    %v867 = vadd.f32 %v865, %v866
    %v868 = vmul.f32 %v867, 0.0078125
    %vm869 = vcmask 0
    %870 = vst.msk [vmem:[#allocation2] sm:$0x1] %vm869, %v868
    // Predicated region
    $region34: #{tpu_custom_call.1} parent=1 // pred_check
      _
    $region35: #{tpu_custom_call.1} parent=1 // pred_check_branch
      %872 = sbr.rel (0) target = $region37
    $region36: #{tpu_custom_call.1} parent=1 // pred_region
      %874 = vsyncadd [#allocation3], 0
      %s876 = sshll.u32 [#allocation2], 4
      %s877 = int_to_ptr.vmem [resolvable:$true] %s876
      %s878 = sshll.u32 %s8, 4
      %s879 = int_to_ptr.hbm [resolvable:$true] %s878
      %881 = dma.vmem_to_hbm [thread:$0]  %s877, 16, %s879, [#allocation3]
    $region37: #{tpu_custom_call.1} parent=1 // pred_fallthru
      _
    // Predicated region
    $region38: #{tpu_custom_call.1} parent=1 // pred_check
      _
    $region39: #{tpu_custom_call.1} parent=1 // pred_check_branch
      %883 = sbr.rel (0) target = $region41
    $region40: #{tpu_custom_call.1} parent=1 // pred_region
      %885 = dma.done [#allocation3], 16
    $region41: #{tpu_custom_call.1} parent=1 // pred_fallthru
      _
    %886 = vsyncpa [#allocation3], 1

</llo_original>
